<compile_context>
chip_gen: v7x
topology: tpu7x:2x2x1
jax: 0.10.0
libtpu: 0.0.40
codegen_flags: <defaults>
</compile_context>

<pallas_src>
import functools
import math

import jax
import jax.numpy as jnp
from jax.experimental import pallas as pl
from jax.experimental.pallas import tpu as pltpu

LAMBDA_1 = 0.5
LAMBDA_2 = 0.3
LAMBDA_3 = 0.1
LAMBDA_4 = 0.1

_LANE_CAP = 2048  # widest lane-dense last dim we consider (multiple of 128)


def _max_tile_bytes():
    """Generation-dependent streaming tile size (per input, per pipeline buffer)."""
    try:
        kind = jax.devices()[0].device_kind.lower()
    except Exception:
        kind = ""
    if "v6" in kind or "v7" in kind:
        return 4 * 1024 * 1024   # 2 inputs x 2 buffers = 16 MiB < 32 MiB scoped VMEM
    return 2 * 1024 * 1024       # v5e / unknown: 8 MiB total < 16 MiB scoped VMEM


def _choose_layout(total_elems, itemsize, sub_align, max_tile_bytes):
    """Pick (lane, rows, tile_rows, pad) for the flattened segmentation slab.

    Prefers a lane (multiple of 128) dividing total_elems exactly so that no
    wrapper-side jnp.pad (an extra HBM copy of both slabs) is needed; only
    falls back to physical padding when no such divisor exists.
    """
    def max_rows(lane_c):
        mr = max(max_tile_bytes // (lane_c * itemsize), sub_align)
        return (mr // sub_align) * sub_align

    aligned_choice = None
    any_choice = None
    for lane_c in range(_LANE_CAP, 127, -128):
        if total_elems % lane_c:
            continue
        rows_c = total_elems // lane_c
        mr = max_rows(lane_c)
        if rows_c <= mr:
            cand = (lane_c, rows_c, rows_c)          # single full-extent block
            is_aligned = (rows_c % sub_align == 0)
        else:
            tr = None
            for d in range(mr, sub_align - 1, -sub_align):
                if rows_c % d == 0:                   # aligned divisor tile
                    tr = d
                    break
            if tr is None:
                continue
            cand = (lane_c, rows_c, tr)
            is_aligned = True
        if any_choice is None:
            any_choice = cand
        if is_aligned:
            aligned_choice = cand
            break
    choice = aligned_choice if aligned_choice is not None else any_choice
    if choice is not None:
        lane, rows, tile_rows = choice
        return lane, rows, tile_rows, 0

    # Fallback: no divisible lane exists -> physical pad (rare).
    lane = 1024
    rows_needed = -(-total_elems // lane)
    tile_rows = min(max_rows(lane), -(-rows_needed // sub_align) * sub_align)
    rows = -(-rows_needed // tile_rows) * tile_rows
    pad = rows * lane - total_elems
    return lane, rows, tile_rows, pad


def _bce_partial_kernel(x_ref, y_ref, part_ref, *, tile_rows, lane, padded,
                        valid_in_last):
    """Per-block BCEWithLogits partial sums, reduced to an (8, 128) vreg."""
    i = pl.program_id(0)
    x = x_ref[...].astype(jnp.float32)
    y = y_ref[...].astype(jnp.float32)
    # stable BCE-with-logits: max(x,0) - x*y + log(1 + exp(-|x|))
    bce = jnp.maximum(x, 0.0) - x * y + jnp.log(1.0 + jnp.exp(-jnp.abs(x)))

    def reduce_write(b):
        # lane-group adds: (tile_rows, lane) -> (tile_rows, 128); pure VPU, vreg-aligned.
        acc = b[:, 0:128]
        for g in range(1, lane // 128):
            acc = acc + b[:, g * 128:(g + 1) * 128]
        # sublane-group adds: (tile_rows, 128) -> (8, 128); tile-aligned slices.
        full = tile_rows // 8
        rem = tile_rows % 8
        if full > 0:
            r = acc[0:8, :]
            for g in range(1, full):
                r = r + acc[g * 8:(g + 1) * 8, :]
            part_ref[...] = r
        else:
            part_ref[...] = jnp.zeros((8, 128), jnp.float32)
        if rem:  # tiny single-block case only (unaligned rows)
            part_ref[0:rem, :] = part_ref[0:rem, :] + acc[full * 8:tile_rows, :]

    if padded:
        last = pl.num_programs(0) - 1

        @pl.when(i == last)   # all padding lives in the last tile; mask only there
        def _():
            rid = jax.lax.broadcasted_iota(jnp.int32, (tile_rows, lane), 0)
            cid = jax.lax.broadcasted_iota(jnp.int32, (tile_rows, lane), 1)
            local = rid * lane + cid                  # tile-local -> no int32 overflow
            reduce_write(jnp.where(local < valid_in_last, bce, 0.0))

        @pl.when(i != last)   # steady-state tiles pay zero masking cost
        def _():
            reduce_write(bce)
    else:
        reduce_write(bce)


def _finalize_kernel(part_ref, l1_ref, t1_ref, l2_ref, t2_ref, l3_ref, t3_ref,
                     out_ref, *, total_elems):
    """Tiny grid-less finalize: combine BCE partials + 3 CE heads -> scalar."""
    bce_mean = jnp.sum(part_ref[...]) * (1.0 / float(total_elems))

    def ce_mean(z_ref, t_ref):
        z = z_ref[...].astype(jnp.float32)            # (B, C)
        t = t_ref[...]                                # (B, 1) int32
        b, c = z.shape
        m = jnp.max(z, axis=-1, keepdims=True)                            # (B, 1)
        lse = m + jnp.log(jnp.sum(jnp.exp(z - m), axis=-1, keepdims=True))  # (B, 1)
        lane_ids = jax.lax.broadcasted_iota(jnp.int32, (b, c), 1)
        picked = jnp.sum(jnp.where(lane_ids == t, z, 0.0), axis=-1, keepdims=True)
        return jnp.sum(lse - picked) * (1.0 / float(b))

    out_ref[0, 0] = (LAMBDA_1 * bce_mean
                     + LAMBDA_2 * ce_mean(l1_ref, t1_ref)
                     + LAMBDA_3 * ce_mean(l2_ref, t2_ref)
                     + LAMBDA_4 * ce_mean(l3_ref, t3_ref))


def combined_loss_123(pred_seg, target_seg,
                      pred_so1, target_so1,
                      pred_so2, target_so2,
                      pred_so3, target_so3):
    total_elems = int(math.prod(pred_seg.shape))
    itemsize = pred_seg.dtype.itemsize
    sub_align = {4: 8, 2: 16, 1: 32}.get(itemsize, 8)   # dtype-aware sublane alignment

    lane, rows, tile_rows, pad = _choose_layout(
        total_elems, itemsize, sub_align, _max_tile_bytes())
    grid_rows = rows // tile_rows
    padded = pad > 0
    valid_in_last = total_elems - (grid_rows - 1) * tile_rows * lane

    def to_slab(t):
        flat = t.reshape(-1)                 # native dtype; f32 cast happens in-kernel
        if padded:
            flat = jnp.pad(flat, (0, pad))   # rare fallback only
        return flat.reshape(rows, lane)

    seg_x = to_slab(pred_seg)
    seg_y = to_slab(target_seg)

    # ---- Kernel A: streaming BCE partial sums (parallel grid, per-block output) ----
    kernel_a = functools.partial(
        _bce_partial_kernel, tile_rows=tile_rows, lane=lane,
        padded=padded, valid_in_last=valid_in_last)
    cost_a = pl.CostEstimate(
        flops=6 * total_elems,
        transcendentals=2 * total_elems,
        bytes_accessed=2 * total_elems * itemsize + grid_rows * 8 * 128 * 4)

    partials = pl.pallas_call(
        kernel_a,
        out_shape=jax.ShapeDtypeStruct((grid_rows * 8, 128), jnp.float32),
        grid=(grid_rows,),
        in_specs=[pl.BlockSpec((tile_rows, lane), lambda i: (i, 0)),
                  pl.BlockSpec((tile_rows, lane), lambda i: (i, 0))],
        out_specs=pl.BlockSpec((8, 128), lambda i: (i, 0)),
        compiler_params=pltpu.CompilerParams(
            dimension_semantics=("parallel",),        # independent blocks -> both v7x TCs
            vmem_limit_bytes=32 * 1024 * 1024),
        cost_estimate=cost_a,
    )(seg_x, seg_y)

    # ---- Kernel B: tiny finalize (partials + 3 CE heads -> weighted scalar) ----
    def prep_tgt(t):
        t = t.reshape(-1, 1)
        return t if t.dtype == jnp.int32 else t.astype(jnp.int32)

    kernel_b = functools.partial(_finalize_kernel, total_elems=total_elems)
    vmem = pl.BlockSpec(memory_space=pltpu.MemorySpace.VMEM)
    out = pl.pallas_call(
        kernel_b,
        out_shape=jax.ShapeDtypeStruct((1, 1), jnp.float32),
        in_specs=[vmem] * 7,
        out_specs=pl.BlockSpec(memory_space=pltpu.MemorySpace.SMEM),
    )(partials,
      pred_so1, prep_tgt(target_so1),
      pred_so2, prep_tgt(target_so2),
      pred_so3, prep_tgt(target_so3))
    return out[0, 0]


def _reference(pred_seg, target_seg, l1, t1, l2, t2, l3, t3):
    # Pure-JAX reference (matches PyTorch BCEWithLogitsLoss / CrossEntropyLoss).
    x = pred_seg.astype(jnp.float32)
    y = target_seg.astype(jnp.float32)
    bce = jnp.mean(jnp.maximum(x, 0) - x * y + jnp.log1p(jnp.exp(-jnp.abs(x))))

    def ce(logits, targets):
        logits = logits.astype(jnp.float32)
        lse = jax.nn.logsumexp(logits, axis=-1)
        picked = jnp.take_along_axis(
            logits, targets[:, None].astype(jnp.int32), axis=-1)[:, 0]
        return jnp.mean(lse - picked)

    return (LAMBDA_1 * bce + LAMBDA_2 * ce(l1, t1)
            + LAMBDA_3 * ce(l2, t2) + LAMBDA_4 * ce(l3, t3))


if __name__ == "__main__":
    key = jax.random.PRNGKey(0)
    k = jax.random.split(key, 8)

    N, C, H, W = 2, 4, 16, 16         # segmentation logits / targets (NCHW)
    B, NUM_CLASSES = 8, 32            # small-object classification heads

    pred_seg = jax.random.normal(k[0], (N, C, H, W), jnp.float32)
    target_seg = (jax.random.uniform(k[1], (N, C, H, W)) > 0.5).astype(jnp.float32)

    pred_so1 = jax.random.normal(k[2], (B, NUM_CLASSES), jnp.float32)
    target_so1 = jax.random.randint(k[3], (B,), 0, NUM_CLASSES)
    pred_so2 = jax.random.normal(k[4], (B, NUM_CLASSES), jnp.float32)
    target_so2 = jax.random.randint(k[5], (B,), 0, NUM_CLASSES)
    pred_so3 = jax.random.normal(k[6], (B, NUM_CLASSES), jnp.float32)
    target_so3 = jax.random.randint(k[7], (B,), 0, NUM_CLASSES)

    loss = combined_loss_123(pred_seg, target_seg,
                             pred_so1, target_so1,
                             pred_so2, target_so2,
                             pred_so3, target_so3)
    loss = jax.block_until_ready(loss)

    ref = _reference(pred_seg, target_seg,
                     pred_so1, target_so1,
                     pred_so2, target_so2,
                     pred_so3, target_so3)
    assert jnp.allclose(loss, ref, rtol=1e-5, atol=1e-5), (loss, ref)

    print("KERNEL_OK")
</pallas_src>

<mosaic_0001>
module attributes {stable_mosaic.version = 11 : i64} {
  func.func @_bce_partial_kernel(%arg0: i32, %arg1: memref<8x256xf32, #tpu.memory_space<vmem>>, %arg2: memref<8x256xf32, #tpu.memory_space<vmem>>, %arg3: memref<8x128xf32, #tpu.memory_space<vmem>>) attributes {dimension_semantics = [#tpu.dimension_semantics<parallel>], iteration_bounds = array<i64: 1>, scalar_prefetch = 0 : i64, scratch_operands = 0 : i64, tpu.core_type = #tpu.core_type<tc>, window_params = [{transform_indices = @transform_0, window_bounds = array<i64: 8, 256>}, {transform_indices = @transform_1, window_bounds = array<i64: 8, 256>}, {transform_indices = @transform_2, window_bounds = array<i64: 8, 128>}]} {
    %c0 = arith.constant 0 : index
    %c0_0 = arith.constant 0 : index
    %0 = vector.load %arg1[%c0, %c0_0] : memref<8x256xf32, #tpu.memory_space<vmem>>, vector<8x256xf32>
    %c0_1 = arith.constant 0 : index
    %c0_2 = arith.constant 0 : index
    %1 = vector.load %arg2[%c0_1, %c0_2] : memref<8x256xf32, #tpu.memory_space<vmem>>, vector<8x256xf32>
    %cst = arith.constant 0.000000e+00 : f32
    %2 = vector.broadcast %cst : f32 to vector<8x256xf32>
    %3 = arith.maximumf %0, %2 : vector<8x256xf32>
    %4 = arith.mulf %0, %1 : vector<8x256xf32>
    %5 = arith.subf %3, %4 : vector<8x256xf32>
    %6 = math.absf %0 : vector<8x256xf32>
    %cst_3 = arith.constant 0.000000e+00 : f32
    %7 = vector.broadcast %cst_3 : f32 to vector<8x256xf32>
    %8 = arith.subf %7, %6 : vector<8x256xf32>
    %9 = math.exp %8 : vector<8x256xf32>
    %cst_4 = arith.constant 1.000000e+00 : f32
    %10 = vector.broadcast %cst_4 : f32 to vector<8x256xf32>
    %11 = arith.addf %10, %9 : vector<8x256xf32>
    %12 = math.log %11 : vector<8x256xf32>
    %13 = arith.addf %5, %12 : vector<8x256xf32>
    %14 = vector.extract_strided_slice %13 {offsets = [0, 0], sizes = [8, 128], strides = [1, 1]} : vector<8x256xf32> to vector<8x128xf32>
    %15 = vector.extract_strided_slice %13 {offsets = [0, 128], sizes = [8, 128], strides = [1, 1]} : vector<8x256xf32> to vector<8x128xf32>
    %16 = arith.addf %14, %15 : vector<8x128xf32>
    %c0_5 = arith.constant 0 : index
    %c0_6 = arith.constant 0 : index
    %17 = vector.load %arg3[%c0_5, %c0_6] : memref<8x128xf32, #tpu.memory_space<vmem>>, vector<8x128xf32>
    tpu.vector_store %arg3[%c0_5, %c0_6], %16 {strides = array<i32>} : memref<8x128xf32, #tpu.memory_space<vmem>>, vector<8x128xf32>,
    return
  }
  func.func @transform_0(%arg0: i32) -> (i32, i32) {
    %c0_i32 = arith.constant 0 : i32
    %c0_i32_0 = arith.constant 0 : i32
    return %arg0, %c0_i32 : i32, i32
  }
  func.func @transform_1(%arg0: i32) -> (i32, i32) {
    %c0_i32 = arith.constant 0 : i32
    %c0_i32_0 = arith.constant 0 : i32
    return %arg0, %c0_i32 : i32, i32
  }
  func.func @transform_2(%arg0: i32) -> (i32, i32) {
    %c0_i32 = arith.constant 0 : i32
    %c0_i32_0 = arith.constant 0 : i32
    return %arg0, %c0_i32 : i32, i32
  }
}

</mosaic_0001>

<llo_original>
// kernel: tpu_custom_call.1
$region0: #{tpu_custom_call.1}
  #allocation0 [shape = 'u32[]', space=smem, size = 0x4, offset = 0x4, fixed_abs, tag = 'smem constant byte address 0x4 - core index']
  #allocation1 [shape = 'u32[144,128]{1,0:T(1,128)}', space=vmem, size = 0x12000, scoped, tag = 'internal scratch']
  %s0 = inlined_call_operand.hbm [shape: f32[8,256], index: 0, kind: input, shape index: {}]
  %s1 = inlined_call_operand.hbm [shape: f32[8,256], index: 1, kind: input, shape index: {}]
  %s2 = inlined_call_operand.hbm [shape: f32[8,128], index: 2, kind: output, shape index: {}]
  %s3 = sld [smem:[#allocation0]]
  $region26: #{tpu_custom_call.1} parent=0
    _
  %s5 = ssub.s32 1, %s3
  %s6 = scalar_select 0, %s5, %s3
  $region1: #{tpu_custom_call.1} parent=0
    #allocation2 [shape = 'u8[8192]{0}', space=vmem, size = 0x2000, scoped, tag = 'input window, operand 0, single buffered']
    #allocation3 [shape = 's32[1]{0}', space=sflag, size = 0x4, scoped, tag = 'scoped memory for tpu_custom_call.1']
    #allocation4 [shape = 's32[1]{0}', space=sflag, size = 0x4, scoped, tag = 'scoped memory for tpu_custom_call.1']
    #allocation5 [shape = 'u8[8192]{0}', space=vmem, size = 0x2000, scoped, tag = 'input window, operand 1, single buffered']
    #allocation6 [shape = 's32[1]{0}', space=sflag, size = 0x4, scoped, tag = 'scoped memory for tpu_custom_call.1']
    #allocation7 [shape = 'u8[4096]{0}', space=vmem, size = 0x1000, scoped, tag = 'output window, operand 0, single buffered']
    %7 = vsyncpa [#allocation3], 0
    %8 = vsyncpa [#allocation6], 0
    %9 = vsyncpa [#allocation4], 0
    // Predicated region
    $region2: #{tpu_custom_call.1} parent=1 // pred_check
      _
    $region3: #{tpu_custom_call.1} parent=1 // pred_check_branch
      %11 = sbr.rel (0) target = $region5
    $region4: #{tpu_custom_call.1} parent=1 // pred_region
      %s13 = ssub.s32 256, 256
      %14 = vsyncadd [#allocation3], %s13
      %s16 = sshll.u32 [#allocation2], 4
      %s17 = int_to_ptr.vmem [resolvable:$true] %s16
      %19 = dma.hbm_to_vmem [thread:$0]  %s0, 256, %s17, [#allocation3]
    $region5: #{tpu_custom_call.1} parent=1 // pred_fallthru
      _
    // Predicated region
    $region6: #{tpu_custom_call.1} parent=1 // pred_check
      _
    $region7: #{tpu_custom_call.1} parent=1 // pred_check_branch
      %21 = sbr.rel (0) target = $region9
    $region8: #{tpu_custom_call.1} parent=1 // pred_region
      %s23 = ssub.s32 256, 256
      %24 = vsyncadd [#allocation6], %s23
      %s26 = sshll.u32 [#allocation5], 4
      %s27 = int_to_ptr.vmem [resolvable:$true] %s26
      %29 = dma.hbm_to_vmem [thread:$0]  %s1, 256, %s27, [#allocation6]
    $region9: #{tpu_custom_call.1} parent=1 // pred_fallthru
      _
    // Predicated region
    $region10: #{tpu_custom_call.1} parent=1 // pred_check
      _
    $region11: #{tpu_custom_call.1} parent=1 // pred_check_branch
      %31 = sbr.rel (0) target = $region13
    $region12: #{tpu_custom_call.1} parent=1 // pred_region
      %32 = dma.done [#allocation3], 256
    $region13: #{tpu_custom_call.1} parent=1 // pred_fallthru
      _
    // Predicated region
    $region14: #{tpu_custom_call.1} parent=1 // pred_check
      _
    $region15: #{tpu_custom_call.1} parent=1 // pred_check_branch
      %34 = sbr.rel (0) target = $region17
    $region16: #{tpu_custom_call.1} parent=1 // pred_region
      %35 = dma.done [#allocation6], 256
    $region17: #{tpu_custom_call.1} parent=1 // pred_fallthru
      _
    %v36 = vld [vmem:[#allocation2] sm:$0xff]
    %v37 = vld [vmem:[#allocation2 + $0x8] sm:$0xff]
    %v38 = vld [vmem:[#allocation5] sm:$0xff]
    %v39 = vld [vmem:[#allocation5 + $0x8] sm:$0xff]
    %v40 = vmax.f32 %v36, 0.0
    %v41 = vmax.f32 %v37, 0.0
    %v42 = vmul.f32 %v36, %v38
    %v43 = vmul.f32 %v37, %v39
    %v44 = vsub.f32 %v40, %v42
    %v45 = vsub.f32 %v41, %v43
    %v46 = vand.u32 2147483647, %v36
    %v47 = vand.u32 2147483647, %v37
    %v48 = vsub.f32 0.0, %v46
    %v49 = vsub.f32 0.0, %v47
    %v50 = vmul.f32 %v48, 1.442695
    %v51 = vpow.pop %v50
    %v52 = vmul.f32 %v49, 1.442695
    %v53 = vpow.pop %v52
    %v54 = vadd.f32 %v51, 1.0
    %v55 = vadd.f32 %v53, 1.0
    %v56 = vlog2.pop %v54
    %v57 = vmul.f32 %v56, 0.6931472
    %v58 = vlog2.pop %v55
    %v59 = vmul.f32 %v58, 0.6931472
    %v60 = vadd.f32 %v44, %v57
    %v61 = vadd.f32 %v45, %v59
    %v62 = vadd.f32 %v60, %v61
    %63 = vst [vmem:[#allocation7] sm:$0xff] %v62
    // Predicated region
    $region18: #{tpu_custom_call.1} parent=1 // pred_check
      _
    $region19: #{tpu_custom_call.1} parent=1 // pred_check_branch
      %65 = sbr.rel (0) target = $region21
    $region20: #{tpu_custom_call.1} parent=1 // pred_region
      %s67 = ssub.s32 128, 128
      %68 = vsyncadd [#allocation4], %s67
      %s70 = sshll.u32 [#allocation7], 4
      %s71 = int_to_ptr.vmem [resolvable:$true] %s70
      %73 = dma.vmem_to_hbm [thread:$0]  %s71, 128, %s2, [#allocation4]
    $region21: #{tpu_custom_call.1} parent=1 // pred_fallthru
      _
    // Predicated region
    $region22: #{tpu_custom_call.1} parent=1 // pred_check
      _
    $region23: #{tpu_custom_call.1} parent=1 // pred_check_branch
      %75 = sbr.rel (0) target = $region25
    $region24: #{tpu_custom_call.1} parent=1 // pred_region
      %76 = dma.done [#allocation4], 128
    $region25: #{tpu_custom_call.1} parent=1 // pred_fallthru
      _
    %77 = vsyncpa [#allocation3], 1
    %78 = vsyncpa [#allocation6], 1
    %79 = vsyncpa [#allocation4], 1

</llo_original>
